<compile_context>
chip_gen: v7x
topology: tpu7x:2x2x1
jax: 0.10.0
libtpu: 0.0.40
codegen_flags: <defaults>
</compile_context>

<pallas_src>
import jax
import jax.numpy as jnp
from jax.experimental import pallas as pl
from jax.experimental.pallas import tpu as pltpu


def _round_up(x, m):
    return (x + m - 1) // m * m


def celoss_kernel(x_ref, w_ref, b_ref, tags_ref, out_ref):
    # x_ref    : (D, tile_n)    f32/bf16  lane-dense features (row index on lanes)
    # w_ref    : (T, D)         f32/bf16  hidden2tag weight (nn.Linear (out,in))
    # b_ref    : (T, 1)         f32       bias
    # tags_ref : (1, tile_n)    int32     gold tag per row, -1 => masked/padded
    # out_ref  : (1, 1, tile_n) f32       per-split lane-parallel partial sums
    i = pl.program_id(1)            # inner ("arbitrary") tile index within a split

    @pl.when(i == 0)
    def _():
        out_ref[...] = jnp.zeros_like(out_ref)

    # Lane-dense logits: (T, tile_n) = (T, D) @ (D, tile_n); f32 accumulation.
    logits = jnp.dot(w_ref[...], x_ref[...],
                     preferred_element_type=jnp.float32) + b_ref[...]

    # Numerically stable log-softmax over the tag axis (T-deep sublane reduce).
    m = jnp.max(logits, axis=0, keepdims=True)                     # (1, tile_n)
    z = logits - m                                                 # (T, tile_n)
    lse = jnp.log(jnp.sum(jnp.exp(z), axis=0, keepdims=True))      # (1, tile_n)

    # Fused gold-tag gather + NaN-safe mask (tag == -1 selects no row).
    tags = tags_ref[...]                                           # (1, tile_n)
    row = jax.lax.broadcasted_iota(jnp.int32, z.shape, 0)
    z_gold = jnp.sum(jnp.where(row == tags, z, 0.0), axis=0, keepdims=True)
    contrib = jnp.where(tags >= 0, z_gold - lse, 0.0)              # (1, tile_n)

    # Lane-parallel accumulate (pure VPU); cross-lane reduce deferred to JAX.
    out_ref[...] += contrib[None]


def celoss_forward(features, tags, seq_lens, weight, bias, *,
                   tile_n=8192, num_splits=2):
    """
    features : (S, B, D)  float (f32 or bf16 -- streamed as-is)
    tags     : (S, B)     int
    seq_lens : (B,)       int (>= 1)
    weight   : (T, D)     float   (hidden2tag.weight, nn.Linear (out, in) layout)
    bias     : (T,)       float
    returns  : scalar float32 loss
    """
    S, B, D = features.shape
    T, D2 = weight.shape
    assert D == D2
    N = S * B

    # Large lane-aligned row tile; clamp to the (128-aligned) row count.
    tile_n = max(128, min(_round_up(tile_n, 128), _round_up(N, 128)))
    n_tiles = pl.cdiv(N, tile_n)
    num_splits = max(1, min(num_splits, n_tiles))    # don't split a single tile
    inner = pl.cdiv(n_tiles, num_splits)
    n_pad = num_splits * inner * tile_n

    # Lane-dense x: (D, N).  One layout-plumbing pass over x (transpose fused
    # with the small tile-boundary zero pad); padded columns give finite logits
    # and are killed by tag == -1 in-kernel.
    # TODO(synk): accept a pre-transposed (D, N) feature layout from upstream
    # to make this pass disappear entirely.
    x = features.reshape(N, D).T                     # (D, N), features.dtype
    if n_pad != N:
        x = jnp.pad(x, ((0, 0), (0, n_pad - N)))

    # Fold the seq_lens mask into the tag stream (-1 = ignore this row).
    # Row r = (t, b) with t = r // B (row-major flatten of (S, B)); summing all
    # rows with t < seq_lens[b] reproduces cumsum(0).gather(seq_lens-1).
    t_idx = jnp.arange(S, dtype=jnp.int32)[:, None]                   # (S, 1)
    valid = t_idx < seq_lens.astype(jnp.int32)[None, :]               # (S, B)
    tags_m = jnp.where(valid, tags.astype(jnp.int32), -1).reshape(1, N)
    if n_pad != N:
        tags_m = jnp.pad(tags_m, ((0, 0), (0, n_pad - N)), constant_values=-1)

    w = weight.astype(x.dtype)                       # (T, D), tiny
    b2 = bias.reshape(T, 1).astype(jnp.float32)      # (T, 1)

    # Explicit VMEM budget: double-buffered streams + resident W/bias +
    # temporaries, with 2x headroom, capped at 32 MiB (portable to v7x 64 MiB).
    itemsize = jnp.dtype(x.dtype).itemsize
    x_buf = _round_up(D, 8) * tile_n * itemsize              # lane-dense, no pad
    tag_buf = 8 * tile_n * 4                                 # sublane pad 1->8
    out_buf = 8 * tile_n * 4
    wb_buf = _round_up(T, 8) * (_round_up(D, 128) * itemsize + 128 * 4)
    interm = 10 * _round_up(T, 8) * tile_n * 4               # logits/exp/temps
    vmem_limit = int(min(max(2 * (2 * (x_buf + tag_buf + out_buf + wb_buf)
                                  + interm), 8 << 20), 32 << 20))

    idx = lambda c, i: (0, c * inner + i)
    partial = pl.pallas_call(
        celoss_kernel,
        out_shape=jax.ShapeDtypeStruct((num_splits, 1, tile_n), jnp.float32),
        grid_spec=pltpu.PrefetchScalarGridSpec(
            num_scalar_prefetch=0,
            grid=(num_splits, inner),
            in_specs=[
                pl.BlockSpec((D, tile_n), idx),              # x: streamed, lane-dense
                pl.BlockSpec((T, D), lambda c, i: (0, 0)),   # W: VMEM-resident
                pl.BlockSpec((T, 1), lambda c, i: (0, 0)),   # bias: VMEM-resident
                pl.BlockSpec((1, tile_n), idx),              # masked tags
            ],
            # One lane-dense partial-sum block per split: resident across the
            # inner reduction axis, distinct per 'parallel' split (no races).
            out_specs=pl.BlockSpec((1, 1, tile_n), lambda c, i: (c, 0, 0)),
        ),
        compiler_params=pltpu.CompilerParams(
            dimension_semantics=("parallel", "arbitrary"),
            vmem_limit_bytes=vmem_limit,
        ),
    )(x, w, b2, tags_m)

    # Tiny final cross-lane reduction + negate outside the kernel.
    return -jnp.sum(partial)


def celoss_reference(features, tags, seq_lens, weight, bias):
    """Plain-JAX reference mirroring the PyTorch forward exactly (f32 math)."""
    logits = jnp.einsum("sbd,td->sbt", features.astype(jnp.float32),
                        weight.astype(jnp.float32)) + bias.astype(jnp.float32)
    logp = jax.nn.log_softmax(logits, axis=2)
    gathered = jnp.take_along_axis(logp, tags[..., None], axis=2)[..., 0]  # (S, B)
    csum = jnp.cumsum(gathered, axis=0)                                    # (S, B)
    picked = csum[seq_lens - 1, jnp.arange(csum.shape[1])]                 # (B,)
    return -jnp.sum(picked)


if __name__ == "__main__":
    key = jax.random.PRNGKey(0)
    k1, k2, k3, k4 = jax.random.split(key, 4)

    # Small shapes implied by the module: seq_len=8, batch=2, feature_dim=32, tags_num=8.
    S, B, D, T = 8, 2, 32, 8
    features = jax.random.normal(k1, (S, B, D), dtype=jnp.float32)
    tags = jax.random.randint(k2, (S, B), 0, T, dtype=jnp.int32)
    seq_lens = jax.random.randint(k3, (B,), 1, S + 1, dtype=jnp.int32)
    weight = jax.random.normal(k4, (T, D), dtype=jnp.float32) * 0.1   # (T, D) Linear layout
    bias = jnp.linspace(-0.1, 0.1, T, dtype=jnp.float32)

    loss = celoss_forward(features, tags, seq_lens, weight, bias)
    jax.block_until_ready(loss)
    ref = celoss_reference(features, tags, seq_lens, weight, bias)
    assert jnp.allclose(loss, ref, rtol=1e-4, atol=1e-4), (loss, ref)

    # Larger shape exercising the multi-tile streaming path with both grid
    # splits active (N = 640 rows -> grid (2, 3) of 128-row tiles, last tile padded).
    S2, B2 = 160, 4
    f2 = jax.random.normal(k1, (S2, B2, D), dtype=jnp.float32)
    t2 = jax.random.randint(k2, (S2, B2), 0, T, dtype=jnp.int32)
    sl2 = jax.random.randint(k3, (B2,), 1, S2 + 1, dtype=jnp.int32)
    loss2 = celoss_forward(f2, t2, sl2, weight, bias, tile_n=128)
    jax.block_until_ready(loss2)
    ref2 = celoss_reference(f2, t2, sl2, weight, bias)
    assert jnp.allclose(loss2, ref2, rtol=1e-4, atol=1e-4), (loss2, ref2)

    # Default (large-tile, single-split) configuration on the same data.
    loss2b = celoss_forward(f2, t2, sl2, weight, bias)
    jax.block_until_ready(loss2b)
    assert jnp.allclose(loss2b, ref2, rtol=1e-4, atol=1e-4), (loss2b, ref2)

    # bf16-source streaming (producer already emits bf16): halves HBM bytes on
    # the x stream; matmul accumulates f32, softmax math stays f32. Looser
    # tolerance vs the f32 reference due to input rounding only.
    loss3 = celoss_forward(f2.astype(jnp.bfloat16), t2, sl2, weight, bias,
                           tile_n=128)
    jax.block_until_ready(loss3)
    assert jnp.allclose(loss3, ref2, rtol=2e-2, atol=2e-2), (loss3, ref2)

    print("KERNEL_OK")
</pallas_src>

<mosaic_0001>
module attributes {stable_mosaic.version = 11 : i64} {
  func.func @celoss_kernel(%arg0: i32, %arg1: i32, %arg2: memref<32x128xf32, #tpu.memory_space<vmem>>, %arg3: memref<8x32xf32, #tpu.memory_space<vmem>>, %arg4: memref<8x1xf32, #tpu.memory_space<vmem>>, %arg5: memref<1x128xi32, #tpu.memory_space<vmem>>, %arg6: memref<1x1x128xf32, #tpu.memory_space<vmem>>) attributes {dimension_semantics = [#tpu.dimension_semantics<parallel>, #tpu.dimension_semantics<arbitrary>], iteration_bounds = array<i64: 1, 1>, scalar_prefetch = 0 : i64, scratch_operands = 0 : i64, tpu.core_type = #tpu.core_type<tc>, window_params = [{transform_indices = @transform_0, window_bounds = array<i64: 32, 128>}, {pipeline_mode = #tpu.pipeline_mode<synchronous>, transform_indices = @transform_1, window_bounds = array<i64: 8, 32>}, {pipeline_mode = #tpu.pipeline_mode<synchronous>, transform_indices = @transform_2, window_bounds = array<i64: 8, 1>}, {transform_indices = @transform_3, window_bounds = array<i64: 1, 128>}, {transform_indices = @transform_4, window_bounds = array<i64: 1, 1, 128>}]} {
    %c0_i32 = arith.constant 0 : i32
    %0 = arith.cmpi eq, %arg1, %c0_i32 : i32
    %1 = arith.extui %0 : i1 to i32
    %c0_i32_0 = arith.constant 0 : i32
    %2 = arith.cmpi ne, %1, %c0_i32_0 : i32
    scf.if %2 {
      %cst_20 = arith.constant 0.000000e+00 : f32
      %34 = vector.broadcast %cst_20 : f32 to vector<1x1x128xf32>
      %c0_21 = arith.constant 0 : index
      %c0_22 = arith.constant 0 : index
      %c0_23 = arith.constant 0 : index
      %35 = vector.load %arg6[%c0_21, %c0_22, %c0_23] : memref<1x1x128xf32, #tpu.memory_space<vmem>>, vector<1x1x128xf32>
      tpu.vector_store %arg6[%c0_21, %c0_22, %c0_23], %34 {strides = array<i32>} : memref<1x1x128xf32, #tpu.memory_space<vmem>>, vector<1x1x128xf32>,
    } else {
    }
    %c0 = arith.constant 0 : index
    %c0_1 = arith.constant 0 : index
    %3 = vector.load %arg3[%c0, %c0_1] : memref<8x32xf32, #tpu.memory_space<vmem>>, vector<8x32xf32>
    %c0_2 = arith.constant 0 : index
    %c0_3 = arith.constant 0 : index
    %4 = vector.load %arg2[%c0_2, %c0_3] : memref<32x128xf32, #tpu.memory_space<vmem>>, vector<32x128xf32>
    %cst = arith.constant dense<0.000000e+00> : vector<8x128xf32>
    %5 = tpu.matmul %3, %4, %cst {dimension_numbers = #tpu.dot_dimension_numbers<[1], [0], [0], [1], [0, 0, 1, 1], [], []>} : vector<8x32xf32>, vector<32x128xf32>, vector<8x128xf32> -> vector<8x128xf32>
    %c0_4 = arith.constant 0 : index
    %c0_5 = arith.constant 0 : index
    %6 = vector.load %arg4[%c0_4, %c0_5] : memref<8x1xf32, #tpu.memory_space<vmem>>, vector<8x1xf32>
    %7 = vector.broadcast %6 : vector<8x1xf32> to vector<8x128xf32>
    %8 = arith.addf %5, %7 : vector<8x128xf32>
    %cst_6 = arith.constant dense<0xFF800000> : vector<128xf32>
    %9 = vector.multi_reduction <maximumf>, %8, %cst_6 [0] : vector<8x128xf32> to vector<128xf32>
    %10 = vector.shape_cast %9 : vector<128xf32> to vector<1x128xf32>
    %11 = vector.broadcast %10 : vector<1x128xf32> to vector<8x128xf32>
    %12 = arith.subf %8, %11 : vector<8x128xf32>
    %13 = math.exp %12 : vector<8x128xf32>
    %cst_7 = arith.constant dense<0.000000e+00> : vector<128xf32>
    %14 = vector.multi_reduction <add>, %13, %cst_7 [0] : vector<8x128xf32> to vector<128xf32>
    %15 = vector.shape_cast %14 : vector<128xf32> to vector<1x128xf32>
    %16 = math.log %15 : vector<1x128xf32>
    %c0_8 = arith.constant 0 : index
    %c0_9 = arith.constant 0 : index
    %17 = vector.load %arg5[%c0_8, %c0_9] : memref<1x128xi32, #tpu.memory_space<vmem>>, vector<1x128xi32>
    %18 = tpu.iota {dimensions = array<i32: 0>} : vector<8x128xi32>
    %19 = vector.broadcast %17 : vector<1x128xi32> to vector<8x128xi32>
    %20 = arith.cmpi eq, %18, %19 : vector<8x128xi32>
    %cst_10 = arith.constant 0.000000e+00 : f32
    %21 = vector.broadcast %cst_10 : f32 to vector<8x128xf32>
    %22 = arith.select %20, %12, %21 : vector<8x128xi1>, vector<8x128xf32>
    %cst_11 = arith.constant dense<0.000000e+00> : vector<128xf32>
    %23 = vector.multi_reduction <add>, %22, %cst_11 [0] : vector<8x128xf32> to vector<128xf32>
    %24 = vector.shape_cast %23 : vector<128xf32> to vector<1x128xf32>
    %c0_i32_12 = arith.constant 0 : i32
    %25 = vector.broadcast %c0_i32_12 : i32 to vector<1x128xi32>
    %26 = arith.cmpi sge, %17, %25 : vector<1x128xi32>
    %27 = arith.subf %24, %16 : vector<1x128xf32>
    %cst_13 = arith.constant 0.000000e+00 : f32
    %28 = vector.broadcast %cst_13 : f32 to vector<1x128xf32>
    %29 = arith.select %26, %27, %28 : vector<1x128xi1>, vector<1x128xf32>
    %c0_14 = arith.constant 0 : index
    %c0_15 = arith.constant 0 : index
    %c0_16 = arith.constant 0 : index
    %30 = vector.load %arg6[%c0_14, %c0_15, %c0_16] : memref<1x1x128xf32, #tpu.memory_space<vmem>>, vector<1x1x128xf32>
    %31 = vector.shape_cast %29 : vector<1x128xf32> to vector<1x1x128xf32>
    %32 = arith.addf %30, %31 : vector<1x1x128xf32>
    %c0_17 = arith.constant 0 : index
    %c0_18 = arith.constant 0 : index
    %c0_19 = arith.constant 0 : index
    %33 = vector.load %arg6[%c0_17, %c0_18, %c0_19] : memref<1x1x128xf32, #tpu.memory_space<vmem>>, vector<1x1x128xf32>
    tpu.vector_store %arg6[%c0_17, %c0_18, %c0_19], %32 {strides = array<i32>} : memref<1x1x128xf32, #tpu.memory_space<vmem>>, vector<1x1x128xf32>,
    return
  }
  func.func @transform_0(%arg0: i32, %arg1: i32) -> (i32, i32) {
    %c1_i32 = arith.constant 1 : i32
    %0 = arith.muli %arg0, %c1_i32 : i32
    %1 = arith.addi %0, %arg1 : i32
    %c0_i32 = arith.constant 0 : i32
    %c0_i32_0 = arith.constant 0 : i32
    return %c0_i32, %1 : i32, i32
  }
  func.func @transform_1(%arg0: i32, %arg1: i32) -> (i32, i32) {
    %c0_i32 = arith.constant 0 : i32
    %c0_i32_0 = arith.constant 0 : i32
    %c0_i32_1 = arith.constant 0 : i32
    return %c0_i32, %c0_i32_0 : i32, i32
  }
  func.func @transform_2(%arg0: i32, %arg1: i32) -> (i32, i32) {
    %c0_i32 = arith.constant 0 : i32
    %c0_i32_0 = arith.constant 0 : i32
    %c0_i32_1 = arith.constant 0 : i32
    return %c0_i32, %c0_i32_0 : i32, i32
  }
  func.func @transform_3(%arg0: i32, %arg1: i32) -> (i32, i32) {
    %c1_i32 = arith.constant 1 : i32
    %0 = arith.muli %arg0, %c1_i32 : i32
    %1 = arith.addi %0, %arg1 : i32
    %c0_i32 = arith.constant 0 : i32
    %c0_i32_0 = arith.constant 0 : i32
    return %c0_i32, %1 : i32, i32
  }
  func.func @transform_4(%arg0: i32, %arg1: i32) -> (i32, i32, i32) {
    %c0_i32 = arith.constant 0 : i32
    %c0_i32_0 = arith.constant 0 : i32
    %c0_i32_1 = arith.constant 0 : i32
    return %arg0, %c0_i32, %c0_i32_0 : i32, i32, i32
  }
}

</mosaic_0001>

<llo_original>
// kernel: tpu_custom_call.1
$region0: #{tpu_custom_call.1}
  #allocation0 [shape = 'u32[]', space=smem, size = 0x4, offset = 0x4, fixed_abs, tag = 'smem constant byte address 0x4 - core index']
  #allocation1 [shape = 'u32[144,128]{1,0:T(1,128)}', space=vmem, size = 0x12000, scoped, tag = 'internal scratch']
  %s0 = inlined_call_operand.hbm [shape: f32[32,128], index: 0, kind: input, shape index: {}]
  %s1 = inlined_call_operand.vmem [shape: f32[8,32], index: 1, kind: input, shape index: {}]
  %s2 = inlined_call_operand.vmem [shape: f32[8,1], index: 2, kind: input, shape index: {}]
  %s3 = inlined_call_operand.vmem [shape: s32[1,128], index: 3, kind: input, shape index: {}]
  %s4 = inlined_call_operand.hbm [shape: f32[1,1,128], index: 4, kind: output, shape index: {}]
  %s5 = sld [smem:[#allocation0]]
  $region34: #{tpu_custom_call.1} parent=0
    _
  %s7 = ssub.s32 1, %s5
  %s8 = scalar_select 0, %s7, %s5
  $region1: #{tpu_custom_call.1} parent=0
    #allocation2 [shape = 'u8[16384]{0}', space=vmem, size = 0x4000, scoped, tag = 'input window, operand 0, single buffered']
    #allocation3 [shape = 's32[1]{0}', space=sflag, size = 0x4, scoped, tag = 'scoped memory for tpu_custom_call.1']
    #allocation4 [shape = 's32[1]{0}', space=sflag, size = 0x4, scoped, tag = 'scoped memory for tpu_custom_call.1']
    #allocation5 [shape = 'u8[512]{0}', space=vmem, size = 0x400, scoped, tag = 'output window, operand 0, single buffered']
    %9 = vsyncpa [#allocation3], 0
    %10 = vsyncpa [#allocation4], 0
    // Predicated region
    $region2: #{tpu_custom_call.1} parent=1 // pred_check
      _
    $region3: #{tpu_custom_call.1} parent=1 // pred_check_branch
      %12 = sbr.rel (0) target = $region5
    $region4: #{tpu_custom_call.1} parent=1 // pred_region
      %s13 = sadd.s32 0, 0
      %s15 = ssub.s32 512, 512
      %16 = vsyncadd [#allocation3], %s15
      %s17 = smul.addr %s13, 128
      %s18 = scalar_lea.hbm %s0, %s17
      %s19 = sshll.u32 [#allocation2], 4
      %s20 = int_to_ptr.vmem [resolvable:$true] %s19
      %25 = dma.hbm_to_vmem [thread:$0]  %s18, 512, %s20, [#allocation3], 128, 128, 8
    $region5: #{tpu_custom_call.1} parent=1 // pred_fallthru
      _
    // Predicated region
    $region6: #{tpu_custom_call.1} parent=1 // pred_check
      _
    $region7: #{tpu_custom_call.1} parent=1 // pred_check_branch
      %27 = sbr.rel (0) target = $region9
    $region8: #{tpu_custom_call.1} parent=1 // pred_region
      _
    $region9: #{tpu_custom_call.1} parent=1 // pred_fallthru
      _
    // Predicated region
    $region10: #{tpu_custom_call.1} parent=1 // pred_check
      _
    $region11: #{tpu_custom_call.1} parent=1 // pred_check_branch
      %29 = sbr.rel (0) target = $region13
    $region12: #{tpu_custom_call.1} parent=1 // pred_region
      _
    $region13: #{tpu_custom_call.1} parent=1 // pred_fallthru
      _
    // Predicated region
    $region14: #{tpu_custom_call.1} parent=1 // pred_check
      _
    $region15: #{tpu_custom_call.1} parent=1 // pred_check_branch
      %31 = sbr.rel (0) target = $region17
    $region16: #{tpu_custom_call.1} parent=1 // pred_region
      %s32 = sadd.s32 0, 0
      %p33 = scmp.lt.s32.totalorder %s32, 0
      %s34 = scalar_select %p33, %s32, 0
      %s35 = scalar_lea.vmem %s3, %s34
      %s36 = sadd.s32 0, 0
    $region17: #{tpu_custom_call.1} parent=1 // pred_fallthru
      _
    // Predicated region
    $region18: #{tpu_custom_call.1} parent=1 // pred_check
      _
    $region19: #{tpu_custom_call.1} parent=1 // pred_check_branch
      %38 = sbr.rel (0) target = $region21
    $region20: #{tpu_custom_call.1} parent=1 // pred_region
      %39 = dma.done [#allocation3], 512
    $region21: #{tpu_custom_call.1} parent=1 // pred_fallthru
      _
    %s40 = sadd.s32 0, 0
    %p41 = scmp.lt.s32.totalorder %s40, 0
    %s42 = scalar_select %p41, %s40, 0
    %s43 = scalar_lea.vmem %s3, %s42
    %s44 = sadd.s32 0, 0
    %s45 = sadd.s32 0, 0
    %p46 = scmp.lt.s32.totalorder %s45, 0
    %s47 = scalar_select %p46, %s45, 0
    %s48 = scalar_lea.vmem %s3, %s47
    %s49 = sadd.s32 0, 0
    %p50 = scmp.eq.s32.totalorder 0, 0
    // Predicated region
    $region22: #{tpu_custom_call.1} parent=1 // pred_check
      %p51 = pneg %p50
    $region23: #{tpu_custom_call.1} parent=1 // pred_check_branch
      %53 = sbr.rel (%p51) target = $region25
    $region24: #{tpu_custom_call.1} parent=1 // pred_region
      %54 = vst [vmem:[#allocation5] sm:$0x1] 0.0
    $region25: #{tpu_custom_call.1} parent=1 // pred_fallthru
      _
    %v55 = vld [vmem:[%s1] sm:$0xff]
    %v56 = vld [vmem:[#allocation2] sm:$0xff]
    %v57 = vld [vmem:[#allocation2 + $0x8] sm:$0xff]
    %v58 = vld [vmem:[#allocation2 + $0x10] sm:$0xff]
    %v59 = vld [vmem:[#allocation2 + $0x18] sm:$0xff]
    %v60 = vld [vmem:[%s2] sm:$0xff]
    %62 = vset.pattern.permute.xlu0 0
    %63 = vperm.xlu0 %62, %v60
    %v64 = vpop.permute.xlu0 %63
    %vm66 = vcmask 261120
    %v68 = vsel %vm66, %v55, 0
    %70 = vmatprep.subr.mxu0 0.0
    %71 = vmatpush1.msra.mxu0 %v56
    %72 = vmatprep.subr.mxu0 0.0
    %73 = vmatpush1.msra.mxu0 %v57
    %74 = vmatprep.subr.mxu0 0.0
    %75 = vmatpush1.msra.mxu0 %v58
    %76 = vmatprep.subr.mxu0 0.0
    %77 = vmatpush1.msra.mxu0 %v59
    %78 = vmatprep.subr.mxu0 0.0
    %79 = vmatpush1.msra.mxu0 0.0
    %80 = vmatprep.subr.mxu0 0.0
    %81 = vmatpush1.msra.mxu0 0.0
    %82 = vmatprep.subr.mxu0 0.0
    %83 = vmatpush1.msra.mxu0 0.0
    %84 = vmatprep.subr.mxu0 0.0
    %85 = vmatpush1.msra.mxu0 0.0
    %86 = vmatprep.subr.mxu0 0.0
    %87 = vmatpush1.msra.mxu0 0.0
    %88 = vmatprep.subr.mxu0 0.0
    %89 = vmatpush1.msra.mxu0 0.0
    %90 = vmatprep.subr.mxu0 0.0
    %91 = vmatpush1.msra.mxu0 0.0
    %92 = vmatprep.subr.mxu0 0.0
    %93 = vmatpush1.msra.mxu0 0.0
    %94 = vmatprep.subr.mxu0 0.0
    %95 = vmatpush1.msra.mxu0 0.0
    %96 = vmatprep.subr.mxu0 0.0
    %97 = vmatpush1.msra.mxu0 0.0
    %98 = vmatprep.subr.mxu0 0.0
    %99 = vmatpush1.msra.mxu0 0.0
    %100 = vmatprep.subr.mxu0 0.0
    %101 = vmatpush1.msra.mxu0 0.0
    %102 = vmatprep.subr.mxu0 0.0
    %103 = vmatpush1.msra.mxu0 0.0
    %104 = vmatprep.subr.mxu0 0.0
    %105 = vmatpush1.msra.mxu0 0.0
    %106 = vmatprep.subr.mxu0 0.0
    %107 = vmatpush1.msra.mxu0 0.0
    %108 = vmatprep.subr.mxu0 0.0
    %109 = vmatpush1.msra.mxu0 0.0
    %110 = vmatprep.subr.mxu0 0.0
    %111 = vmatpush1.msra.mxu0 0.0
    %112 = vmatprep.subr.mxu0 0.0
    %113 = vmatpush1.msra.mxu0 0.0
    %114 = vmatprep.subr.mxu0 0.0
    %115 = vmatpush1.msra.mxu0 0.0
    %116 = vmatprep.subr.mxu0 0.0
    %117 = vmatpush1.msra.mxu0 0.0
    %118 = vmatprep.subr.mxu0 0.0
    %119 = vmatpush1.msra.mxu0 0.0
    %120 = vmatprep.subr.mxu0 0.0
    %121 = vmatpush1.msra.mxu0 0.0
    %122 = vmatprep.subr.mxu0 0.0
    %123 = vmatpush1.msra.mxu0 0.0
    %124 = vmatprep.subr.mxu0 0.0
    %125 = vmatpush1.msra.mxu0 0.0
    %126 = vmatprep.subr.mxu0 0.0
    %127 = vmatpush1.msra.mxu0 0.0
    %128 = vmatprep.subr.mxu0 0.0
    %129 = vmatpush1.msra.mxu0 0.0
    %130 = vmatprep.subr.mxu0 0.0
    %131 = vmatpush1.msra.mxu0 0.0
    %132 = vmatprep.subr.mxu0 0.0
    %133 = vmatpush1.msra.mxu0 0.0
    %134 = vmatprep.mubr.f32.mxu0 0.0
    %135 = vmatmul.mubr.f32.gmra.mrb[0].mxu0 %v68
    %v136 = vpop.f32.mrb[0].mxu0
    %v137 = vadd.f32 %v64, %v136
    %v138 = vpop.f32.mrb[0].mxu0
    %139 = vdwg.mxu0
    %v140 = vrot.slane %v137, 4
    %v141 = vmax.f32 %v137, %v140
    %v142 = vrot.slane %v141, 2
    %v143 = vmax.f32 %v141, %v142
    %v144 = vrot.slane %v143, 1
    %v145 = vmax.f32 %v143, %v144
    %v146 = vsub.f32 %v137, %v145
    %v147 = vmul.f32 %v146, 1.442695
    %v148 = vpow.pop %v147
    %v149 = vrot.slane %v148, 4
    %v150 = vadd.f32 %v148, %v149
    %v151 = vrot.slane %v150, 2
    %v152 = vadd.f32 %v150, %v151
    %v153 = vrot.slane %v152, 1
    %v154 = vadd.f32 %v152, %v153
    %v155 = vlog2.pop %v154
    %v156 = vmul.f32 %v155, 0.6931472
    %v157 = vld [vmem:[%s48] sm:$0x1]
    %v158 = vlaneseq
    %v159 = vshrl.u32 %v158, 7
    %v160 = vlaneseq
    %v161 = vshrl.u32 %v160, 7
    %v162 = vsub.s32 0, %v161
    %v163 = vrot.slane %v157, %v162
    %vm164 = vcmp.eq.s32.totalorder %v159, %v163
    %v165 = vsel %vm164, %v146, 0.0
    %v166 = vrot.slane %v165, 4
    %v167 = vadd.f32 %v165, %v166
    %v168 = vrot.slane %v167, 2
    %v169 = vadd.f32 %v167, %v168
    %v170 = vrot.slane %v169, 1
    %v171 = vadd.f32 %v169, %v170
    %vm172 = vcmp.ge.s32.totalorder %v157, 0
    %v173 = vsub.f32 %v171, %v156
    %v174 = vsel %vm172, %v173, 0.0
    %v175 = vld [vmem:[#allocation5] sm:$0x1]
    %v176 = vadd.f32 %v175, %v174
    %177 = vst [vmem:[#allocation5] sm:$0x1] %v176
    // Predicated region
    $region26: #{tpu_custom_call.1} parent=1 // pred_check
      _
    $region27: #{tpu_custom_call.1} parent=1 // pred_check_branch
      %179 = sbr.rel (0) target = $region29
    $region28: #{tpu_custom_call.1} parent=1 // pred_region
      %s181 = ssub.s32 16, 16
      %182 = vsyncadd [#allocation4], %s181
      %s184 = sshll.u32 [#allocation5], 4
      %s185 = int_to_ptr.vmem [resolvable:$true] %s184
      %187 = dma.vmem_to_hbm [thread:$0]  %s185, 16, %s4, [#allocation4]
    $region29: #{tpu_custom_call.1} parent=1 // pred_fallthru
      _
    // Predicated region
    $region30: #{tpu_custom_call.1} parent=1 // pred_check
      _
    $region31: #{tpu_custom_call.1} parent=1 // pred_check_branch
      %189 = sbr.rel (0) target = $region33
    $region32: #{tpu_custom_call.1} parent=1 // pred_region
      %190 = dma.done [#allocation4], 16
    $region33: #{tpu_custom_call.1} parent=1 // pred_fallthru
      _
    %191 = vsyncpa [#allocation3], 1
    %192 = vsyncpa [#allocation4], 1

</llo_original>
